<compile_context>
chip_gen: v7x
topology: tpu7x:2x2x1
jax: 0.10.0
libtpu: 0.0.40
codegen_flags: <defaults>
</compile_context>

<pallas_src>
import functools

import jax
import jax.numpy as jnp
from jax import lax
from jax.experimental import pallas as pl
from jax.experimental.pallas import tpu as pltpu

_LANES = 128
_SMALL_D_MAX = 256          # whole-matrix-in-one-block path up to this size


# --------------------------------------------------------------------------
# Kernel 1: small D — whole (D, D) matrix as a single un-gridded block.
# --------------------------------------------------------------------------
def _diag_exp_whole_kernel(logcov_ref, cov_ref):
    """cov[r, c] = exp(logcov[c]) if r == c else 0.  Exact shape, no padding."""
    shape = cov_ref.shape                                   # (d, d)
    row = lax.broadcasted_iota(jnp.int32, shape, 0)
    col = lax.broadcasted_iota(jnp.int32, shape, 1)
    vals = jnp.exp(logcov_ref[...])                         # (1, d), EUP
    cov_ref[...] = jnp.where(row == col, vals, 0.0)         # sublane broadcast


# --------------------------------------------------------------------------
# Kernel 2: large D — diagonal blocks only, over a pre-zeroed aliased output.
# --------------------------------------------------------------------------
def _diag_exp_diag_block_kernel(logcov_ref, zeros_hbm_ref, cov_ref, *, tile, d):
    """Writes diagonal block i of the covariance.

    logcov_ref   : (1, tile) f32, segment i of logCovDiag (edge block padded)
    zeros_hbm_ref: raw HBM ref of the pre-zeroed output (aliased); never read —
                   it only exists so the zero-filled buffer is donated.
    cov_ref      : (tile, tile) f32 output block at grid position (i, i)
    """
    del zeros_hbm_ref
    i = pl.program_id(0)
    shape = cov_ref.shape                                   # (tile, tile)
    lrow = lax.broadcasted_iota(jnp.int32, shape, 0)
    lcol = lax.broadcasted_iota(jnp.int32, shape, 1)
    grow = i * tile + lrow                                  # global row index
    vals = jnp.exp(logcov_ref[...])                         # (1, tile)
    # `grow < d` masks the padded tail of the last block so exp(pad) never
    # produces spurious values (writeback masking would also drop them, but
    # this keeps the VMEM block well-defined and costs one VPU cmp+and).
    is_diag = (lrow == lcol) & (grow < d)
    cov_ref[...] = jnp.where(is_diag, vals, 0.0)


# --------------------------------------------------------------------------
# Wrappers.
# --------------------------------------------------------------------------
def _diag_exp_small(logcov, d):
    return pl.pallas_call(
        _diag_exp_whole_kernel,
        out_shape=jax.ShapeDtypeStruct((d, d), jnp.float32),
        in_specs=[pl.BlockSpec(memory_space=pltpu.MemorySpace.VMEM)],
        out_specs=pl.BlockSpec(memory_space=pltpu.MemorySpace.VMEM),
    )(logcov.reshape(1, d))


def _diag_exp_large(logcov, d):
    # Tile selection: 1 MiB f32 tiles max (2 MiB double-buffered output ->
    # safe under v5e's 16 MiB scoped-VMEM default as well as v6e/v7x's 32 MiB).
    if d >= 1024:
        tile = 512
    elif d >= 512:
        tile = 256
    else:
        tile = 128
    num_blocks = pl.cdiv(d, tile)                 # >= 2, so v7x's 2 TCs both work

    # Off-diagonal zeros come from a plain XLA memset; the buffer is donated
    # into the pallas_call and only the diagonal blocks are (re)written.
    zeros = jnp.zeros((d, d), jnp.float32)
    logcov2d = logcov.reshape(1, d)

    grid_spec = pltpu.PrefetchScalarGridSpec(
        num_scalar_prefetch=0,
        grid=(num_blocks,),
        in_specs=[
            pl.BlockSpec((1, tile), lambda i: (0, i)),      # logCovDiag segment i
            pl.BlockSpec(memory_space=pl.ANY),              # aliased zeroed output
        ],
        out_specs=pl.BlockSpec((tile, tile), lambda i: (i, i)),
    )

    return pl.pallas_call(
        functools.partial(_diag_exp_diag_block_kernel, tile=tile, d=d),
        out_shape=jax.ShapeDtypeStruct((d, d), jnp.float32),
        grid_spec=grid_spec,
        input_output_aliases={1: 0},
        compiler_params=pltpu.CompilerParams(
            dimension_semantics=("parallel",)),
        cost_estimate=pl.CostEstimate(
            flops=0,
            transcendentals=d,
            bytes_accessed=4 * (num_blocks * tile * tile + d)),
    )(logcov2d, zeros)


def _diag_exp_cov(log_cov_diag):
    """diag(exp(log_cov_diag)) as a (D, D) float32 matrix via Pallas."""
    d = log_cov_diag.shape[0]
    logcov = log_cov_diag.astype(jnp.float32)
    if d <= _SMALL_D_MAX:
        return _diag_exp_small(logcov, d)
    return _diag_exp_large(logcov, d)


def variational_inference_forward(q_mu, log_cov_diag):
    """Matches VariationalInferenceModel.forward(): (q_mu, diag(exp(logCovDiag)))."""
    # q_mu is a pure pass-through: no kernel / DMA work.
    q_cov = _diag_exp_cov(log_cov_diag)
    return q_mu, q_cov


# --------------------------------------------------------------------------
# Demo / self-check.
# --------------------------------------------------------------------------
if __name__ == "__main__":
    situation_dim = 32  # small, TPU-friendly size

    # Deterministic parameter init (mirrors torch.randn in __init__).
    key = jax.random.PRNGKey(0)
    k_mu, k_cov = jax.random.split(key)
    q_mu = jax.random.normal(k_mu, (situation_dim,), dtype=jnp.float32)
    log_cov_diag = jax.random.normal(k_cov, (situation_dim,), dtype=jnp.float32)

    fwd = jax.jit(variational_inference_forward)

    mu_out, cov_out = fwd(q_mu, log_cov_diag)
    jax.block_until_ready((mu_out, cov_out))

    ref_cov = jnp.diag(jnp.exp(log_cov_diag))
    assert mu_out.shape == (situation_dim,)
    assert cov_out.shape == (situation_dim, situation_dim)
    assert jnp.allclose(mu_out, q_mu, rtol=1e-5, atol=1e-6)
    assert jnp.allclose(cov_out, ref_cov, rtol=1e-5, atol=1e-6)

    # Also exercise: non-aligned small D (48), aligned large D (384 -> three
    # 128x128 diagonal blocks) and non-aligned large D (300 -> partial edge
    # block, masked by the in-kernel `grow < d` test).
    for d_extra in (48, 384, 300):
        kk = jax.random.PRNGKey(d_extra)
        km, kc = jax.random.split(kk)
        mu_e = jax.random.normal(km, (d_extra,), dtype=jnp.float32)
        lc_e = jax.random.normal(kc, (d_extra,), dtype=jnp.float32)
        mu_o, cov_o = fwd(mu_e, lc_e)
        jax.block_until_ready((mu_o, cov_o))
        assert cov_o.shape == (d_extra, d_extra)
        assert jnp.allclose(mu_o, mu_e)
        assert jnp.allclose(cov_o, jnp.diag(jnp.exp(lc_e)), rtol=1e-5, atol=1e-6)

    print("KERNEL_OK")
</pallas_src>

<mosaic_0001>
module attributes {stable_mosaic.version = 11 : i64} {
  func.func @_diag_exp_whole_kernel(%arg0: memref<1x32xf32, #tpu.memory_space<vmem>>, %arg1: memref<32x32xf32, #tpu.memory_space<vmem>>) attributes {dimension_semantics = [], scalar_prefetch = 0 : i64, scratch_operands = 0 : i64, tpu.core_type = #tpu.core_type<tc>} {
    %0 = tpu.iota {dimensions = array<i32: 0>} : vector<32x32xi32>
    %1 = tpu.iota {dimensions = array<i32: 1>} : vector<32x32xi32>
    %c0 = arith.constant 0 : index
    %c0_0 = arith.constant 0 : index
    %2 = vector.load %arg0[%c0, %c0_0] : memref<1x32xf32, #tpu.memory_space<vmem>>, vector<1x32xf32>
    %3 = math.exp %2 : vector<1x32xf32>
    %4 = arith.cmpi eq, %0, %1 : vector<32x32xi32>
    %cst = arith.constant 0.000000e+00 : f32
    %5 = vector.shape_cast %3 : vector<1x32xf32> to vector<1x32xf32>
    %6 = vector.broadcast %5 : vector<1x32xf32> to vector<32x32xf32>
    %7 = vector.broadcast %cst : f32 to vector<32x32xf32>
    %8 = arith.select %4, %6, %7 : vector<32x32xi1>, vector<32x32xf32>
    %c0_1 = arith.constant 0 : index
    %c0_2 = arith.constant 0 : index
    %9 = vector.load %arg1[%c0_1, %c0_2] : memref<32x32xf32, #tpu.memory_space<vmem>>, vector<32x32xf32>
    tpu.vector_store %arg1[%c0_1, %c0_2], %8 {strides = array<i32>} : memref<32x32xf32, #tpu.memory_space<vmem>>, vector<32x32xf32>,
    return
  }
}

</mosaic_0001>

<llo_original>
// kernel: variational_inference_forward.1
$region0: #{variational_inference_forward.1}
  #allocation0 [shape = 'u32[]', space=smem, size = 0x4, offset = 0x4, fixed_abs, tag = 'smem constant byte address 0x4 - core index']
  #allocation1 [shape = 'u32[144,128]{1,0:T(1,128)}', space=vmem, size = 0x12000, scoped, tag = 'internal scratch']
  %s0 = inlined_call_operand.vmem [shape: f32[1,32], index: 0, kind: input, shape index: {}]
  %s1 = inlined_call_operand.hbm [shape: f32[32,32], index: 1, kind: output, shape index: {}]
  %s2 = sld [smem:[#allocation0]]
  $region14: #{variational_inference_forward.1} parent=0
    _
  %s4 = ssub.s32 1, %s2
  %s5 = scalar_select 0, %s4, %s2
  $region1: #{variational_inference_forward.1} parent=0
    #allocation2 [shape = 'u8[16384]{0}', space=vmem, size = 0x4000, scoped, tag = 'output window, operand 0, single buffered']
    #allocation3 [shape = 's32[1]{0}', space=sflag, size = 0x4, scoped, tag = 'scoped memory for variational_inference_forward.1']
    %6 = vsyncpa [#allocation3], 0
    // Predicated region
    $region2: #{variational_inference_forward.1} parent=1 // pred_check
      _
    $region3: #{variational_inference_forward.1} parent=1 // pred_check_branch
      %8 = sbr.rel (0) target = $region5
    $region4: #{variational_inference_forward.1} parent=1 // pred_region
      _
    $region5: #{variational_inference_forward.1} parent=1 // pred_fallthru
      _
    %v9 = vlaneseq
    %v10 = vshrl.u32 %v9, 7
    %v11 = vadd.s32 %v10, 8
    %v12 = vadd.s32 %v10, 16
    %v13 = vadd.s32 %v10, 24
    %v14 = vlaneseq
    %v15 = vand.u32 %v14, 127
    %v16 = vld [vmem:[%s0] sm:$0x1]
    %v17 = vmul.f32 %v16, 1.442695
    %v18 = vpow.pop %v17
    %vm19 = vcmp.eq.s32.totalorder %v10, %v15
    %vm20 = vcmp.eq.s32.totalorder %v11, %v15
    %vm21 = vcmp.eq.s32.totalorder %v12, %v15
    %vm22 = vcmp.eq.s32.totalorder %v13, %v15
    %v24 = vlaneseq
    %v25 = vshrl.u32 %v24, 7
    %v26 = vsub.s32 0, %v25
    %v27 = vrot.slane %v18, %v26
    %v29 = vsel %vm19, %v27, 0.0
    %v30 = vsel %vm20, %v27, 0.0
    %v31 = vsel %vm21, %v27, 0.0
    %v32 = vsel %vm22, %v27, 0.0
    %vm33 = vcmask 261120
    %34 = vst.msk [vmem:[#allocation2] sm:$0xff] %vm33, %v29
    %35 = vst.msk [vmem:[#allocation2 + $0x8] sm:$0xff] %vm33, %v30
    %36 = vst.msk [vmem:[#allocation2 + $0x10] sm:$0xff] %vm33, %v31
    %37 = vst.msk [vmem:[#allocation2 + $0x18] sm:$0xff] %vm33, %v32
    // Predicated region
    $region6: #{variational_inference_forward.1} parent=1 // pred_check
      _
    $region7: #{variational_inference_forward.1} parent=1 // pred_check_branch
      %39 = sbr.rel (0) target = $region9
    $region8: #{variational_inference_forward.1} parent=1 // pred_region
      %s41 = ssub.s32 512, 512
      %42 = vsyncadd [#allocation3], %s41
      %s43 = sshll.u32 [#allocation2], 4
      %s44 = int_to_ptr.vmem [resolvable:$true] %s43
      %49 = dma.vmem_to_hbm [thread:$0]  %s44, 512, %s1, [#allocation3], 128, 128, 8
    $region9: #{variational_inference_forward.1} parent=1 // pred_fallthru
      _
    // Predicated region
    $region10: #{variational_inference_forward.1} parent=1 // pred_check
      _
    $region11: #{variational_inference_forward.1} parent=1 // pred_check_branch
      %51 = sbr.rel (0) target = $region13
    $region12: #{variational_inference_forward.1} parent=1 // pred_region
      %52 = dma.done [#allocation3], 512
    $region13: #{variational_inference_forward.1} parent=1 // pred_fallthru
      _
    %53 = vsyncpa [#allocation3], 1

</llo_original>
